<compile_context>
chip_gen: v7x
topology: tpu7x:2x2x1
jax: 0.10.0
libtpu: 0.0.40
codegen_flags: <defaults>
</compile_context>

<pallas_src>
import jax
import jax.numpy as jnp
from jax.experimental import pallas as pl
from jax.experimental.pallas import tpu as pltpu


def _round_up(v, m):
    return (v + m - 1) // m * m


def _pick_tile(pref, total, align):
    """Largest multiple of `align` that is <= pref and divides `total`
    (total is guaranteed to be a multiple of `align`)."""
    t = min(pref, total)
    t = (t // align) * align
    t = max(t, align)
    while total % t != 0:
        t -= align
    return t


# ----------------------------------------------------------------------------
# Kernels
# ----------------------------------------------------------------------------
def _linear_single_kernel(x_ref, w_ref, b_ref, o_ref):
    # Whole problem in one block: o = x @ w + b.
    x_blk = x_ref[...]
    if w_ref.dtype != jnp.float32:
        x_blk = x_blk.astype(w_ref.dtype)
    o_ref[...] = (
        jnp.dot(x_blk, w_ref[...], preferred_element_type=jnp.float32)
        + b_ref[...]
    ).astype(o_ref.dtype)


def _linear_tiled_kernel(x_ref, w_ref, b_ref, o_ref):
    # x_ref: (tm, tk), w_ref: (tk, tn), b_ref: (1, tn), o_ref: (tm, tn) f32.
    # Output block is resident across the K axis -> accumulate directly
    # into o_ref (no scratch); initialize with the bias at k == 0.
    k = pl.program_id(2)

    @pl.when(k == 0)
    def _init():
        o_ref[...] = jnp.broadcast_to(b_ref[...], o_ref.shape)

    x_blk = x_ref[...]
    if w_ref.dtype != jnp.float32:
        x_blk = x_blk.astype(w_ref.dtype)
    o_ref[...] += jnp.dot(x_blk, w_ref[...], preferred_element_type=jnp.float32)


# ----------------------------------------------------------------------------
# pallas_call wrappers
# ----------------------------------------------------------------------------
def _pallas_linear_single(x, w_t, b2d):
    B, D = x.shape
    _, C = w_t.shape
    return pl.pallas_call(
        _linear_single_kernel,
        out_shape=jax.ShapeDtypeStruct((B, C), jnp.float32),
        grid=(1,),
        in_specs=[
            pl.BlockSpec((B, D), lambda i: (0, 0)),
            pl.BlockSpec((D, C), lambda i: (0, 0)),
            pl.BlockSpec((1, C), lambda i: (0, 0)),
        ],
        out_specs=pl.BlockSpec((B, C), lambda i: (0, 0)),
    )(x, w_t, b2d)


def _pallas_linear_tiled(x_p, w_p, b_p, tm, tn, tk, vmem_limit):
    Mp, Kp = x_p.shape
    _, Np = w_p.shape
    grid = (Mp // tm, Np // tn, Kp // tk)
    return pl.pallas_call(
        _linear_tiled_kernel,
        out_shape=jax.ShapeDtypeStruct((Mp, Np), jnp.float32),
        grid_spec=pltpu.PrefetchScalarGridSpec(
            num_scalar_prefetch=0,
            grid=grid,
            in_specs=[
                pl.BlockSpec((tm, tk), lambda i, j, k: (i, k)),
                pl.BlockSpec((tk, tn), lambda i, j, k: (k, j)),
                pl.BlockSpec((1, tn), lambda i, j, k: (0, j)),
            ],
            out_specs=pl.BlockSpec((tm, tn), lambda i, j, k: (i, j)),
        ),
        compiler_params=pltpu.CompilerParams(
            dimension_semantics=("parallel", "parallel", "arbitrary"),
            vmem_limit_bytes=vmem_limit,
        ),
    )(x_p, w_p, b_p)


# ----------------------------------------------------------------------------
# Module factory
# ----------------------------------------------------------------------------
def make_mlp_forward(weight, bias, *, param_dtype=None, tm=256, tn=256, tk=512):
    """weight: (C, D) torch layout; bias: (C,). Returns jitted x (B,D)->(B,C).

    Parameters are transposed / padded / cast ONCE here (never per call).
    param_dtype=jnp.bfloat16 halves weight HBM traffic (accumulation stays f32).
    """
    C, D = weight.shape
    wdt = jnp.dtype(param_dtype) if param_dtype is not None else jnp.dtype(weight.dtype)

    # --- single-block path params (no padding at all) -----------------------
    SMALL_W_BYTES = 4 * 2**20
    SMALL_TOTAL_BYTES = 6 * 2**20
    small_possible = D * C * 4 <= SMALL_W_BYTES
    if small_possible:
        w_small = weight.T.astype(wdt)                       # (D, C)
        b_small = bias.reshape(1, C).astype(jnp.float32)     # (1, C)

    # --- tiled path params: pad K/N to 128 (not to tk/tn) -------------------
    Kp = _round_up(D, 128)
    Np = _round_up(C, 128)
    tn_ = _pick_tile(tn, Np, 128)
    tk_ = _pick_tile(tk, Kp, 128)
    w_pad = jnp.zeros((Kp, Np), wdt).at[:D, :C].set(weight.T.astype(wdt))
    b_pad = jnp.zeros((1, Np), jnp.float32).at[0, :C].set(bias.astype(jnp.float32))
    w_item = jnp.dtype(wdt).itemsize

    def forward(x):
        B, Dx = x.shape
        assert Dx == D, "input feature dim mismatch"

        # Tiny problems: one block, full-extent shapes, zero pad/slice work.
        if small_possible and (B * (D + C) + D * C) * 4 <= SMALL_TOTAL_BYTES:
            return _pallas_linear_single(x, w_small, b_small)

        # Tiled path.
        Mp = _round_up(B, 8)
        tm_ = _pick_tile(tm, Mp, 8)
        x_p = x
        if (Mp, Kp) != (B, D):
            x_p = jnp.zeros((Mp, Kp), x.dtype).at[:B, :D].set(x)

        # Double-buffered inputs + resident f32 output tile, with headroom.
        ws = 2 * (tm_ * tk_ * 4 + tk_ * tn_ * w_item + tn_ * 4) + 2 * tm_ * tn_ * 4
        vmem_limit = int(min(64 * 2**20, max(32 * 2**20, 3 * ws)))

        out_p = _pallas_linear_tiled(x_p, w_pad, b_pad, tm_, tn_, tk_, vmem_limit)
        if (Mp, Np) != (B, C):
            out_p = out_p[:B, :C]
        return out_p

    return jax.jit(forward)


if __name__ == "__main__":
    # Shapes consistent with the module: batch=8, input_size=32, num_classes=16
    batch, input_size, num_classes = 8, 32, 16

    key = jax.random.PRNGKey(0)
    kx, kw, kb = jax.random.split(key, 3)

    # Deterministic parameter init (mimics nn.Linear's U(-1/sqrt(fan_in), ...))
    bound = 1.0 / (input_size ** 0.5)
    weight = jax.random.uniform(
        kw, (num_classes, input_size), jnp.float32, minval=-bound, maxval=bound
    )
    bias = jax.random.uniform(
        kb, (num_classes,), jnp.float32, minval=-bound, maxval=bound
    )
    x = jax.random.normal(kx, (batch, input_size), jnp.float32)

    # 1) Shipped tiny shape -> single-block path, f32 exact.
    forward = make_mlp_forward(weight, bias)
    y = jax.block_until_ready(forward(x))
    y_ref = x @ weight.T + bias
    assert y.shape == (batch, num_classes)
    assert jnp.allclose(y, y_ref, atol=1e-5, rtol=1e-5)

    # 2) Larger shape -> tiled path (grid over M/N/K, bias-init accumulation).
    B2, D2, C2 = 1024, 1024, 384
    k2 = jax.random.PRNGKey(1)
    kx2, kw2, kb2 = jax.random.split(k2, 3)
    w2 = jax.random.normal(kw2, (C2, D2), jnp.float32) * 0.03
    b2 = jax.random.normal(kb2, (C2,), jnp.float32) * 0.03
    x2 = jax.random.normal(kx2, (B2, D2), jnp.float32)
    fwd2 = make_mlp_forward(w2, b2)
    y2 = jax.block_until_ready(fwd2(x2))
    y2_ref = x2 @ w2.T + b2
    assert y2.shape == (B2, C2)
    assert jnp.allclose(y2, y2_ref, atol=1e-3, rtol=1e-3)

    # 3) bf16-stored weights (mem-bound GEMV optimization), f32 accumulation.
    fwd3 = make_mlp_forward(weight, bias, param_dtype=jnp.bfloat16)
    y3 = jax.block_until_ready(fwd3(x))
    y3_ref = x @ weight.T.astype(jnp.bfloat16).astype(jnp.float32) + bias
    assert jnp.allclose(y3, y3_ref, atol=2e-2, rtol=2e-2)

    print("KERNEL_OK")
</pallas_src>

<mosaic_0001>
module attributes {stable_mosaic.version = 11 : i64} {
  func.func @_linear_single_kernel(%arg0: i32, %arg1: memref<8x32xf32, #tpu.memory_space<vmem>>, %arg2: memref<32x16xf32, #tpu.memory_space<vmem>>, %arg3: memref<1x16xf32, #tpu.memory_space<vmem>>, %arg4: memref<8x16xf32, #tpu.memory_space<vmem>>) attributes {dimension_semantics = [#tpu.dimension_semantics<arbitrary>], iteration_bounds = array<i64: 1>, scalar_prefetch = 0 : i64, scratch_operands = 0 : i64, tpu.core_type = #tpu.core_type<tc>, window_params = [{pipeline_mode = #tpu.pipeline_mode<synchronous>, transform_indices = @transform_0, window_bounds = array<i64: 8, 32>}, {pipeline_mode = #tpu.pipeline_mode<synchronous>, transform_indices = @transform_1, window_bounds = array<i64: 32, 16>}, {pipeline_mode = #tpu.pipeline_mode<synchronous>, transform_indices = @transform_2, window_bounds = array<i64: 1, 16>}, {pipeline_mode = #tpu.pipeline_mode<synchronous>, transform_indices = @transform_3, window_bounds = array<i64: 8, 16>}]} {
    %c0 = arith.constant 0 : index
    %c0_0 = arith.constant 0 : index
    %0 = vector.load %arg1[%c0, %c0_0] : memref<8x32xf32, #tpu.memory_space<vmem>>, vector<8x32xf32>
    %c0_1 = arith.constant 0 : index
    %c0_2 = arith.constant 0 : index
    %1 = vector.load %arg2[%c0_1, %c0_2] : memref<32x16xf32, #tpu.memory_space<vmem>>, vector<32x16xf32>
    %cst = arith.constant dense<0.000000e+00> : vector<8x16xf32>
    %2 = tpu.matmul %0, %1, %cst {dimension_numbers = #tpu.dot_dimension_numbers<[1], [0], [0], [1], [0, 0, 1, 1], [], []>} : vector<8x32xf32>, vector<32x16xf32>, vector<8x16xf32> -> vector<8x16xf32>
    %c0_3 = arith.constant 0 : index
    %c0_4 = arith.constant 0 : index
    %3 = vector.load %arg3[%c0_3, %c0_4] : memref<1x16xf32, #tpu.memory_space<vmem>>, vector<1x16xf32>
    %4 = vector.broadcast %3 : vector<1x16xf32> to vector<8x16xf32>
    %5 = arith.addf %2, %4 : vector<8x16xf32>
    %c0_5 = arith.constant 0 : index
    %c0_6 = arith.constant 0 : index
    %6 = vector.load %arg4[%c0_5, %c0_6] : memref<8x16xf32, #tpu.memory_space<vmem>>, vector<8x16xf32>
    tpu.vector_store %arg4[%c0_5, %c0_6], %5 {strides = array<i32>} : memref<8x16xf32, #tpu.memory_space<vmem>>, vector<8x16xf32>,
    return
  }
  func.func @transform_0(%arg0: i32) -> (i32, i32) {
    %c0_i32 = arith.constant 0 : i32
    %c0_i32_0 = arith.constant 0 : i32
    %c0_i32_1 = arith.constant 0 : i32
    return %c0_i32, %c0_i32_0 : i32, i32
  }
  func.func @transform_1(%arg0: i32) -> (i32, i32) {
    %c0_i32 = arith.constant 0 : i32
    %c0_i32_0 = arith.constant 0 : i32
    %c0_i32_1 = arith.constant 0 : i32
    return %c0_i32, %c0_i32_0 : i32, i32
  }
  func.func @transform_2(%arg0: i32) -> (i32, i32) {
    %c0_i32 = arith.constant 0 : i32
    %c0_i32_0 = arith.constant 0 : i32
    %c0_i32_1 = arith.constant 0 : i32
    return %c0_i32, %c0_i32_0 : i32, i32
  }
  func.func @transform_3(%arg0: i32) -> (i32, i32) {
    %c0_i32 = arith.constant 0 : i32
    %c0_i32_0 = arith.constant 0 : i32
    %c0_i32_1 = arith.constant 0 : i32
    return %c0_i32, %c0_i32_0 : i32, i32
  }
}

</mosaic_0001>

<llo_original>
// kernel: forward.1
$region0: #{forward.1}
  #allocation0 [shape = 'u32[]', space=smem, size = 0x4, offset = 0x4, fixed_abs, tag = 'smem constant byte address 0x4 - core index']
  #allocation1 [shape = 'u32[144,128]{1,0:T(1,128)}', space=vmem, size = 0x12000, scoped, tag = 'internal scratch']
  %s0 = inlined_call_operand.hbm [shape: f32[8,32], index: 0, kind: input, shape index: {}]
  %s1 = inlined_call_operand.hbm [shape: f32[32,16], index: 1, kind: input, shape index: {}]
  %s2 = inlined_call_operand.vmem [shape: f32[1,16], index: 2, kind: input, shape index: {}]
  %s3 = inlined_call_operand.hbm [shape: f32[8,16], index: 3, kind: output, shape index: {}]
  %s4 = sld [smem:[#allocation0]]
  $region30: #{forward.1} parent=0
    _
  %s6 = ssub.s32 1, %s4
  %s7 = scalar_select 0, %s6, %s4
  $region1: #{forward.1} parent=0
    #allocation2 [shape = 'u8[4096]{0}', space=vmem, size = 0x1000, scoped, tag = 'input window, operand 0, single buffered']
    #allocation3 [shape = 's32[1]{0}', space=sflag, size = 0x4, scoped, tag = 'scoped memory for forward.1']
    #allocation4 [shape = 's32[1]{0}', space=sflag, size = 0x4, scoped, tag = 'scoped memory for forward.1']
    #allocation5 [shape = 'u8[16384]{0}', space=vmem, size = 0x4000, scoped, tag = 'input window, operand 1, single buffered']
    #allocation6 [shape = 's32[1]{0}', space=sflag, size = 0x4, scoped, tag = 'scoped memory for forward.1']
    #allocation7 [shape = 'u8[4096]{0}', space=vmem, size = 0x1000, scoped, tag = 'output window, operand 0, single buffered']
    %8 = vsyncpa [#allocation3], 0
    %9 = vsyncpa [#allocation6], 0
    %10 = vsyncpa [#allocation4], 0
    // Predicated region
    $region2: #{forward.1} parent=1 // pred_check
      _
    $region3: #{forward.1} parent=1 // pred_check_branch
      %12 = sbr.rel (0) target = $region5
    $region4: #{forward.1} parent=1 // pred_region
      %s14 = ssub.s32 128, 128
      %15 = vsyncadd [#allocation3], %s14
      %s17 = sshll.u32 [#allocation2], 4
      %s18 = int_to_ptr.vmem [resolvable:$true] %s17
      %20 = dma.hbm_to_vmem [thread:$0]  %s0, 128, %s18, [#allocation3]
    $region5: #{forward.1} parent=1 // pred_fallthru
      _
    // Predicated region
    $region6: #{forward.1} parent=1 // pred_check
      _
    $region7: #{forward.1} parent=1 // pred_check_branch
      %22 = sbr.rel (0) target = $region9
    $region8: #{forward.1} parent=1 // pred_region
      %s24 = ssub.s32 512, 512
      %25 = vsyncadd [#allocation6], %s24
      %s26 = sshll.u32 [#allocation5], 4
      %s27 = int_to_ptr.vmem [resolvable:$true] %s26
      %32 = dma.hbm_to_vmem [thread:$0]  %s1, 512, %s27, [#allocation6], 128, 128, 8
    $region9: #{forward.1} parent=1 // pred_fallthru
      _
    // Predicated region
    $region10: #{forward.1} parent=1 // pred_check
      _
    $region11: #{forward.1} parent=1 // pred_check_branch
      %34 = sbr.rel (0) target = $region13
    $region12: #{forward.1} parent=1 // pred_region
      _
    $region13: #{forward.1} parent=1 // pred_fallthru
      _
    // Predicated region
    $region14: #{forward.1} parent=1 // pred_check
      _
    $region15: #{forward.1} parent=1 // pred_check_branch
      %36 = sbr.rel (0) target = $region17
    $region16: #{forward.1} parent=1 // pred_region
      %37 = dma.done [#allocation3], 128
    $region17: #{forward.1} parent=1 // pred_fallthru
      _
    // Predicated region
    $region18: #{forward.1} parent=1 // pred_check
      _
    $region19: #{forward.1} parent=1 // pred_check_branch
      %39 = sbr.rel (0) target = $region21
    $region20: #{forward.1} parent=1 // pred_region
      %40 = dma.done [#allocation6], 512
    $region21: #{forward.1} parent=1 // pred_fallthru
      _
    %v41 = vld [vmem:[#allocation2] sm:$0xff]
    %v42 = vld [vmem:[#allocation5] sm:$0xff]
    %v43 = vld [vmem:[#allocation5 + $0x8] sm:$0xff]
    %v44 = vld [vmem:[#allocation5 + $0x10] sm:$0xff]
    %v45 = vld [vmem:[#allocation5 + $0x18] sm:$0xff]
    %v46 = vld [vmem:[%s2] sm:$0x1]
    %v48 = vlaneseq
    %v49 = vshrl.u32 %v48, 7
    %v50 = vsub.s32 0, %v49
    %v51 = vrot.slane %v46, %v50
    %vm53 = vcmask 261120
    %v55 = vsel %vm53, %v41, 0
    %57 = vmatprep.subr.mxu0 0.0
    %58 = vmatpush1.msra.mxu0 %v42
    %59 = vmatprep.subr.mxu0 0.0
    %60 = vmatpush1.msra.mxu0 %v43
    %61 = vmatprep.subr.mxu0 0.0
    %62 = vmatpush1.msra.mxu0 %v44
    %63 = vmatprep.subr.mxu0 0.0
    %64 = vmatpush1.msra.mxu0 %v45
    %65 = vmatprep.subr.mxu0 0.0
    %66 = vmatpush1.msra.mxu0 0.0
    %67 = vmatprep.subr.mxu0 0.0
    %68 = vmatpush1.msra.mxu0 0.0
    %69 = vmatprep.subr.mxu0 0.0
    %70 = vmatpush1.msra.mxu0 0.0
    %71 = vmatprep.subr.mxu0 0.0
    %72 = vmatpush1.msra.mxu0 0.0
    %73 = vmatprep.subr.mxu0 0.0
    %74 = vmatpush1.msra.mxu0 0.0
    %75 = vmatprep.subr.mxu0 0.0
    %76 = vmatpush1.msra.mxu0 0.0
    %77 = vmatprep.subr.mxu0 0.0
    %78 = vmatpush1.msra.mxu0 0.0
    %79 = vmatprep.subr.mxu0 0.0
    %80 = vmatpush1.msra.mxu0 0.0
    %81 = vmatprep.subr.mxu0 0.0
    %82 = vmatpush1.msra.mxu0 0.0
    %83 = vmatprep.subr.mxu0 0.0
    %84 = vmatpush1.msra.mxu0 0.0
    %85 = vmatprep.subr.mxu0 0.0
    %86 = vmatpush1.msra.mxu0 0.0
    %87 = vmatprep.subr.mxu0 0.0
    %88 = vmatpush1.msra.mxu0 0.0
    %89 = vmatprep.subr.mxu0 0.0
    %90 = vmatpush1.msra.mxu0 0.0
    %91 = vmatprep.subr.mxu0 0.0
    %92 = vmatpush1.msra.mxu0 0.0
    %93 = vmatprep.subr.mxu0 0.0
    %94 = vmatpush1.msra.mxu0 0.0
    %95 = vmatprep.subr.mxu0 0.0
    %96 = vmatpush1.msra.mxu0 0.0
    %97 = vmatprep.subr.mxu0 0.0
    %98 = vmatpush1.msra.mxu0 0.0
    %99 = vmatprep.subr.mxu0 0.0
    %100 = vmatpush1.msra.mxu0 0.0
    %101 = vmatprep.subr.mxu0 0.0
    %102 = vmatpush1.msra.mxu0 0.0
    %103 = vmatprep.subr.mxu0 0.0
    %104 = vmatpush1.msra.mxu0 0.0
    %105 = vmatprep.subr.mxu0 0.0
    %106 = vmatpush1.msra.mxu0 0.0
    %107 = vmatprep.subr.mxu0 0.0
    %108 = vmatpush1.msra.mxu0 0.0
    %109 = vmatprep.subr.mxu0 0.0
    %110 = vmatpush1.msra.mxu0 0.0
    %111 = vmatprep.subr.mxu0 0.0
    %112 = vmatpush1.msra.mxu0 0.0
    %113 = vmatprep.subr.mxu0 0.0
    %114 = vmatpush1.msra.mxu0 0.0
    %115 = vmatprep.subr.mxu0 0.0
    %116 = vmatpush1.msra.mxu0 0.0
    %117 = vmatprep.subr.mxu0 0.0
    %118 = vmatpush1.msra.mxu0 0.0
    %119 = vmatprep.subr.mxu0 0.0
    %120 = vmatpush1.msra.mxu0 0.0
    %121 = vmatprep.mubr.f32.mxu0 0.0
    %122 = vmatmul.mubr.f32.gmra.mrb[0].mxu0 %v55
    %v123 = vpop.f32.mrb[0].mxu0
    %v124 = vadd.f32 %v51, %v123
    %v125 = vpop.f32.mrb[0].mxu0
    %126 = vdwg.mxu0
    %vm127 = vcmask 130048
    %128 = vst.msk [vmem:[#allocation7] sm:$0xff] %vm127, %v124
    // Predicated region
    $region22: #{forward.1} parent=1 // pred_check
      _
    $region23: #{forward.1} parent=1 // pred_check_branch
      %130 = sbr.rel (0) target = $region25
    $region24: #{forward.1} parent=1 // pred_region
      %s132 = ssub.s32 128, 128
      %133 = vsyncadd [#allocation4], %s132
      %s135 = sshll.u32 [#allocation7], 4
      %s136 = int_to_ptr.vmem [resolvable:$true] %s135
      %138 = dma.vmem_to_hbm [thread:$0]  %s136, 128, %s3, [#allocation4]
    $region25: #{forward.1} parent=1 // pred_fallthru
      _
    // Predicated region
    $region26: #{forward.1} parent=1 // pred_check
      _
    $region27: #{forward.1} parent=1 // pred_check_branch
      %140 = sbr.rel (0) target = $region29
    $region28: #{forward.1} parent=1 // pred_region
      %141 = dma.done [#allocation4], 128
    $region29: #{forward.1} parent=1 // pred_fallthru
      _
    %142 = vsyncpa [#allocation3], 1
    %143 = vsyncpa [#allocation6], 1
    %144 = vsyncpa [#allocation4], 1

</llo_original>
